<compile_context>
chip_gen: v7x
topology: tpu7x:2x2x1
jax: 0.10.0
libtpu: 0.0.40
codegen_flags: <defaults>
</compile_context>

<pallas_src>
import functools

import jax
import jax.numpy as jnp
from jax import lax
from jax.experimental import pallas as pl
from jax.experimental.pallas import tpu as pltpu

MAX_PAD = 3   # largest kernel is 7 -> padding 3
LANE = 128    # TPU lane width


# ----------------------------------------------------------------------------
# Parameter construction (deterministic, mirrors nn.Conv2d + kaiming_normal_)
# ----------------------------------------------------------------------------
def make_conv_params(key, in_c, out_c, num_kernels=6):
    """7 Conv2d weights/biases, kaiming_normal_(mode='fan_out', relu), bias=0."""
    specs = []
    for i in range(num_kernels // 2):
        specs.append((1, 2 * i + 3))   # [1, 2i+3], padding [0, i+1]
        specs.append((2 * i + 3, 1))   # [2i+3, 1], padding [i+1, 0]
    specs.append((1, 1))               # 1x1
    keys = jax.random.split(key, len(specs))
    weights, biases = [], []
    for k, (kh, kw) in zip(keys, specs):
        fan_out = out_c * kh * kw
        std = (2.0 / fan_out) ** 0.5
        w = jax.random.normal(k, (out_c, in_c, kh, kw), jnp.float32) * std
        b = jnp.zeros((out_c,), jnp.float32)
        weights.append(w)
        biases.append(b)
    return specs, weights, biases


def combine_weights(specs, weights, biases, in_c, out_c):
    """Fold mean-of-7-convs into a 13-tap cross stencil of [Cin, Cout] mats."""
    n = len(specs)
    offsets = [(0, 0)]
    for d in range(1, MAX_PAD + 1):
        offsets += [(0, -d), (0, d), (-d, 0), (d, 0)]
    acc = {off: jnp.zeros((in_c, out_c), jnp.float32) for off in offsets}
    for (kh, kw), w in zip(specs, weights):
        ph, pw = (kh - 1) // 2, (kw - 1) // 2
        for jh in range(kh):
            for jw in range(kw):
                off = (jh - ph, jw - pw)
                acc[off] = acc[off] + w[:, :, jh, jw].T        # [Cin, Cout]
    w_stack = jnp.stack([acc[off] for off in offsets], axis=0) / float(n)
    b_comb = (sum(biases) / float(n)).reshape(1, out_c)
    return offsets, w_stack, b_comb


# ----------------------------------------------------------------------------
# Pallas kernel: one fused [rows, 13*Cin] x [13*Cin, Cout_pad] matmul per tile
# ----------------------------------------------------------------------------
def _inception_kernel(x_ref, w_ref, b_ref, o_ref, *, offsets, ht, W):
    # x_ref: [1, ht+6, W+6, Cin]   (padded row-tile, halo included)
    # w_ref: [13*Cin, Cout_pad]    (combined per-offset weights, lane-padded)
    # b_ref: [1, Cout_pad]
    # o_ref: [1, ht, W, Cout_pad]  (lane-dense output tile)
    cin = x_ref.shape[-1]
    cout_p = o_ref.shape[-1]

    # Build the fused LHS: 13 shifted windows concatenated on the channel axis.
    cols = []
    for (dh, dw) in offsets:
        cols.append(x_ref[0,
                          MAX_PAD + dh: MAX_PAD + dh + ht,
                          MAX_PAD + dw: MAX_PAD + dw + W,
                          :])                                   # [ht, W, Cin]
    lhs = jnp.concatenate(cols, axis=-1)                        # [ht, W, 13*Cin]
    lhs = lhs.reshape(ht * W, len(offsets) * cin)               # [rows, 13*Cin]

    # Single MXU matmul with K = 13*Cin, N = Cout_pad (full 128-lane tile).
    acc = jnp.dot(lhs, w_ref[...], preferred_element_type=jnp.float32)
    acc = acc + b_ref[...]                                      # broadcast bias
    o_ref[0] = acc.reshape(ht, W, cout_p).astype(o_ref.dtype)   # unmasked vst


def inception_block_v2(x_nchw, offsets, w_stack, b_comb, *, h_tile=8):
    N, cin, H, W = x_nchw.shape
    n_off = w_stack.shape[0]
    cout = w_stack.shape[-1]
    cout_pad = ((cout + LANE - 1) // LANE) * LANE

    # Flatten + lane-pad the weights / bias (zero columns -> exact after slice).
    w_flat = w_stack.reshape(n_off * cin, cout)
    w_flat = jnp.pad(w_flat, ((0, 0), (0, cout_pad - cout)))
    b_pad = jnp.pad(b_comb, ((0, 0), (0, cout_pad - cout)))

    # NCHW -> NHWC and spatial zero padding.
    x = jnp.transpose(x_nchw, (0, 2, 3, 1))                     # [N, H, W, Cin]
    h_tile = min(h_tile, H)
    n_t = (H + h_tile - 1) // h_tile
    h_full = n_t * h_tile
    x_pad = jnp.pad(
        x, ((0, 0), (MAX_PAD, MAX_PAD + (h_full - H)), (MAX_PAD, MAX_PAD), (0, 0)))
    Wp = W + 2 * MAX_PAD
    ht_pad = h_tile + 2 * MAX_PAD

    # Overlapping row tiles (3-row halo on each side), duplicated host-side so
    # the kernel uses plain non-overlapping Blocked indexing.
    tiles = jnp.stack(
        [x_pad[:, t * h_tile: t * h_tile + ht_pad] for t in range(n_t)], axis=1)
    tiles = tiles.reshape(N * n_t, ht_pad, Wp, cin)             # [NT, ht+6, Wp, Cin]

    kernel = functools.partial(
        _inception_kernel, offsets=tuple(offsets), ht=h_tile, W=W)

    out = pl.pallas_call(
        kernel,
        out_shape=jax.ShapeDtypeStruct((N * n_t, h_tile, W, cout_pad), x.dtype),
        grid_spec=pltpu.PrefetchScalarGridSpec(
            num_scalar_prefetch=0,
            grid=(N * n_t,),
            in_specs=[
                pl.BlockSpec((1, ht_pad, Wp, cin), lambda i: (i, 0, 0, 0)),
                pl.BlockSpec((n_off * cin, cout_pad), lambda i: (0, 0)),
                pl.BlockSpec((1, cout_pad), lambda i: (0, 0)),
            ],
            out_specs=pl.BlockSpec((1, h_tile, W, cout_pad),
                                   lambda i: (i, 0, 0, 0)),
        ),
        compiler_params=pltpu.CompilerParams(
            dimension_semantics=("parallel",)),
    )(tiles, w_flat, b_pad)

    # [NT, ht, W, Cout_pad] -> [N, H, W, Cout] -> NCHW
    out = out.reshape(N, h_full, W, cout_pad)[:, :H, :, :cout]
    return jnp.transpose(out, (0, 3, 1, 2))


# ----------------------------------------------------------------------------
# Plain-JAX reference (exact PyTorch semantics: 7 convs, stack, mean)
# ----------------------------------------------------------------------------
def reference(x_nchw, specs, weights, biases):
    outs = []
    for (kh, kw), w, b in zip(specs, weights, biases):
        ph, pw = (kh - 1) // 2, (kw - 1) // 2
        y = lax.conv_general_dilated(
            x_nchw, w, window_strides=(1, 1),
            padding=((ph, ph), (pw, pw)),
            dimension_numbers=("NCHW", "OIHW", "NCHW"))
        outs.append(y + b[None, :, None, None])
    return jnp.mean(jnp.stack(outs, axis=-1), axis=-1)


if __name__ == "__main__":
    key = jax.random.PRNGKey(0)
    k_x, k_w = jax.random.split(key)

    N, C_IN, C_OUT, H, W = 2, 4, 8, 16, 16
    x = jax.random.normal(k_x, (N, C_IN, H, W), jnp.float32)    # NCHW like PyTorch

    specs, weights, biases = make_conv_params(k_w, C_IN, C_OUT, num_kernels=6)
    offsets, w_stack, b_comb = combine_weights(specs, weights, biases, C_IN, C_OUT)

    out = inception_block_v2(x, offsets, w_stack, b_comb, h_tile=8)
    out = jax.block_until_ready(out)

    ref = jax.block_until_ready(reference(x, specs, weights, biases))
    assert out.shape == (N, C_OUT, H, W), out.shape
    assert jnp.allclose(out, ref, atol=1e-4, rtol=1e-4), float(jnp.max(jnp.abs(out - ref)))

    print("KERNEL_OK")
</pallas_src>

<mosaic_0001>
module attributes {stable_mosaic.version = 11 : i64} {
  func.func @_inception_kernel(%arg0: i32, %arg1: memref<1x14x22x4xf32, #tpu.memory_space<vmem>>, %arg2: memref<52x128xf32, #tpu.memory_space<vmem>>, %arg3: memref<1x128xf32, #tpu.memory_space<vmem>>, %arg4: memref<1x8x16x128xf32, #tpu.memory_space<vmem>>) attributes {dimension_semantics = [#tpu.dimension_semantics<parallel>], iteration_bounds = array<i64: 4>, scalar_prefetch = 0 : i64, scratch_operands = 0 : i64, tpu.core_type = #tpu.core_type<tc>, window_params = [{transform_indices = @transform_0, window_bounds = array<i64: 1, 14, 22, 4>}, {pipeline_mode = #tpu.pipeline_mode<synchronous>, transform_indices = @transform_1, window_bounds = array<i64: 52, 128>}, {pipeline_mode = #tpu.pipeline_mode<synchronous>, transform_indices = @transform_2, window_bounds = array<i64: 1, 128>}, {transform_indices = @transform_3, window_bounds = array<i64: 1, 8, 16, 128>}]} {
    %c0 = arith.constant 0 : index
    %c3 = arith.constant 3 : index
    %c3_0 = arith.constant 3 : index
    %c0_1 = arith.constant 0 : index
    %0 = vector.load %arg1[%c0, %c3, %c3_0, %c0_1] : memref<1x14x22x4xf32, #tpu.memory_space<vmem>>, vector<1x8x16x4xf32>
    %1 = vector.shape_cast %0 : vector<1x8x16x4xf32> to vector<8x16x4xf32>
    %c0_2 = arith.constant 0 : index
    %c3_3 = arith.constant 3 : index
    %c2 = arith.constant 2 : index
    %c0_4 = arith.constant 0 : index
    %2 = vector.load %arg1[%c0_2, %c3_3, %c2, %c0_4] : memref<1x14x22x4xf32, #tpu.memory_space<vmem>>, vector<1x8x16x4xf32>
    %3 = vector.shape_cast %2 : vector<1x8x16x4xf32> to vector<8x16x4xf32>
    %c0_5 = arith.constant 0 : index
    %c3_6 = arith.constant 3 : index
    %c4 = arith.constant 4 : index
    %c0_7 = arith.constant 0 : index
    %4 = vector.load %arg1[%c0_5, %c3_6, %c4, %c0_7] : memref<1x14x22x4xf32, #tpu.memory_space<vmem>>, vector<1x8x16x4xf32>
    %5 = vector.shape_cast %4 : vector<1x8x16x4xf32> to vector<8x16x4xf32>
    %c0_8 = arith.constant 0 : index
    %c2_9 = arith.constant 2 : index
    %c3_10 = arith.constant 3 : index
    %c0_11 = arith.constant 0 : index
    %6 = vector.load %arg1[%c0_8, %c2_9, %c3_10, %c0_11] : memref<1x14x22x4xf32, #tpu.memory_space<vmem>>, vector<1x8x16x4xf32>
    %7 = vector.shape_cast %6 : vector<1x8x16x4xf32> to vector<8x16x4xf32>
    %c0_12 = arith.constant 0 : index
    %c4_13 = arith.constant 4 : index
    %c3_14 = arith.constant 3 : index
    %c0_15 = arith.constant 0 : index
    %8 = vector.load %arg1[%c0_12, %c4_13, %c3_14, %c0_15] : memref<1x14x22x4xf32, #tpu.memory_space<vmem>>, vector<1x8x16x4xf32>
    %9 = vector.shape_cast %8 : vector<1x8x16x4xf32> to vector<8x16x4xf32>
    %c0_16 = arith.constant 0 : index
    %c3_17 = arith.constant 3 : index
    %c1 = arith.constant 1 : index
    %c0_18 = arith.constant 0 : index
    %10 = vector.load %arg1[%c0_16, %c3_17, %c1, %c0_18] : memref<1x14x22x4xf32, #tpu.memory_space<vmem>>, vector<1x8x16x4xf32>
    %11 = vector.shape_cast %10 : vector<1x8x16x4xf32> to vector<8x16x4xf32>
    %c0_19 = arith.constant 0 : index
    %c3_20 = arith.constant 3 : index
    %c5 = arith.constant 5 : index
    %c0_21 = arith.constant 0 : index
    %12 = vector.load %arg1[%c0_19, %c3_20, %c5, %c0_21] : memref<1x14x22x4xf32, #tpu.memory_space<vmem>>, vector<1x8x16x4xf32>
    %13 = vector.shape_cast %12 : vector<1x8x16x4xf32> to vector<8x16x4xf32>
    %c0_22 = arith.constant 0 : index
    %c1_23 = arith.constant 1 : index
    %c3_24 = arith.constant 3 : index
    %c0_25 = arith.constant 0 : index
    %14 = vector.load %arg1[%c0_22, %c1_23, %c3_24, %c0_25] : memref<1x14x22x4xf32, #tpu.memory_space<vmem>>, vector<1x8x16x4xf32>
    %15 = vector.shape_cast %14 : vector<1x8x16x4xf32> to vector<8x16x4xf32>
    %c0_26 = arith.constant 0 : index
    %c5_27 = arith.constant 5 : index
    %c3_28 = arith.constant 3 : index
    %c0_29 = arith.constant 0 : index
    %16 = vector.load %arg1[%c0_26, %c5_27, %c3_28, %c0_29] : memref<1x14x22x4xf32, #tpu.memory_space<vmem>>, vector<1x8x16x4xf32>
    %17 = vector.shape_cast %16 : vector<1x8x16x4xf32> to vector<8x16x4xf32>
    %c0_30 = arith.constant 0 : index
    %c3_31 = arith.constant 3 : index
    %c0_32 = arith.constant 0 : index
    %c0_33 = arith.constant 0 : index
    %18 = vector.load %arg1[%c0_30, %c3_31, %c0_32, %c0_33] : memref<1x14x22x4xf32, #tpu.memory_space<vmem>>, vector<1x8x16x4xf32>
    %19 = vector.shape_cast %18 : vector<1x8x16x4xf32> to vector<8x16x4xf32>
    %c0_34 = arith.constant 0 : index
    %c3_35 = arith.constant 3 : index
    %c6 = arith.constant 6 : index
    %c0_36 = arith.constant 0 : index
    %20 = vector.load %arg1[%c0_34, %c3_35, %c6, %c0_36] : memref<1x14x22x4xf32, #tpu.memory_space<vmem>>, vector<1x8x16x4xf32>
    %21 = vector.shape_cast %20 : vector<1x8x16x4xf32> to vector<8x16x4xf32>
    %c0_37 = arith.constant 0 : index
    %c0_38 = arith.constant 0 : index
    %c3_39 = arith.constant 3 : index
    %c0_40 = arith.constant 0 : index
    %22 = vector.load %arg1[%c0_37, %c0_38, %c3_39, %c0_40] : memref<1x14x22x4xf32, #tpu.memory_space<vmem>>, vector<1x8x16x4xf32>
    %23 = vector.shape_cast %22 : vector<1x8x16x4xf32> to vector<8x16x4xf32>
    %c0_41 = arith.constant 0 : index
    %c6_42 = arith.constant 6 : index
    %c3_43 = arith.constant 3 : index
    %c0_44 = arith.constant 0 : index
    %24 = vector.load %arg1[%c0_41, %c6_42, %c3_43, %c0_44] : memref<1x14x22x4xf32, #tpu.memory_space<vmem>>, vector<1x8x16x4xf32>
    %25 = vector.shape_cast %24 : vector<1x8x16x4xf32> to vector<8x16x4xf32>
    %26 = tpu.concatenate %1, %3, %5, %7, %9, %11, %13, %15, %17, %19, %21, %23, %25 in 2 : vector<8x16x4xf32>, vector<8x16x4xf32>, vector<8x16x4xf32>, vector<8x16x4xf32>, vector<8x16x4xf32>, vector<8x16x4xf32>, vector<8x16x4xf32>, vector<8x16x4xf32>, vector<8x16x4xf32>, vector<8x16x4xf32>, vector<8x16x4xf32>, vector<8x16x4xf32>, vector<8x16x4xf32> -> vector<8x16x52xf32>
    %27 = vector.shape_cast %26 : vector<8x16x52xf32> to vector<128x52xf32>
    %c0_45 = arith.constant 0 : index
    %c0_46 = arith.constant 0 : index
    %28 = vector.load %arg2[%c0_45, %c0_46] : memref<52x128xf32, #tpu.memory_space<vmem>>, vector<52x128xf32>
    %cst = arith.constant dense<0.000000e+00> : vector<128x128xf32>
    %29 = tpu.matmul %27, %28, %cst {dimension_numbers = #tpu.dot_dimension_numbers<[1], [0], [0], [1], [0, 0, 1, 1], [], []>} : vector<128x52xf32>, vector<52x128xf32>, vector<128x128xf32> -> vector<128x128xf32>
    %c0_47 = arith.constant 0 : index
    %c0_48 = arith.constant 0 : index
    %30 = vector.load %arg3[%c0_47, %c0_48] : memref<1x128xf32, #tpu.memory_space<vmem>>, vector<1x128xf32>
    %31 = vector.broadcast %30 : vector<1x128xf32> to vector<128x128xf32>
    %32 = arith.addf %29, %31 : vector<128x128xf32>
    %33 = vector.shape_cast %32 : vector<128x128xf32> to vector<8x16x128xf32>
    %c0_49 = arith.constant 0 : index
    %c0_50 = arith.constant 0 : index
    %c0_51 = arith.constant 0 : index
    %c0_52 = arith.constant 0 : index
    %34 = vector.load %arg4[%c0_49, %c0_50, %c0_51, %c0_52] : memref<1x8x16x128xf32, #tpu.memory_space<vmem>>, vector<1x8x16x128xf32>
    %35 = vector.shape_cast %34 : vector<1x8x16x128xf32> to vector<8x16x128xf32>
    %36 = vector.shape_cast %33 : vector<8x16x128xf32> to vector<1x8x16x128xf32>
    tpu.vector_store %arg4[%c0_49, %c0_50, %c0_51, %c0_52], %36 {strides = array<i32>} : memref<1x8x16x128xf32, #tpu.memory_space<vmem>>, vector<1x8x16x128xf32>,
    return
  }
  func.func @transform_0(%arg0: i32) -> (i32, i32, i32, i32) {
    %c0_i32 = arith.constant 0 : i32
    %c0_i32_0 = arith.constant 0 : i32
    %c0_i32_1 = arith.constant 0 : i32
    %c0_i32_2 = arith.constant 0 : i32
    return %arg0, %c0_i32, %c0_i32_0, %c0_i32_1 : i32, i32, i32, i32
  }
  func.func @transform_1(%arg0: i32) -> (i32, i32) {
    %c0_i32 = arith.constant 0 : i32
    %c0_i32_0 = arith.constant 0 : i32
    %c0_i32_1 = arith.constant 0 : i32
    return %c0_i32, %c0_i32_0 : i32, i32
  }
  func.func @transform_2(%arg0: i32) -> (i32, i32) {
    %c0_i32 = arith.constant 0 : i32
    %c0_i32_0 = arith.constant 0 : i32
    %c0_i32_1 = arith.constant 0 : i32
    return %c0_i32, %c0_i32_0 : i32, i32
  }
  func.func @transform_3(%arg0: i32) -> (i32, i32, i32, i32) {
    %c0_i32 = arith.constant 0 : i32
    %c0_i32_0 = arith.constant 0 : i32
    %c0_i32_1 = arith.constant 0 : i32
    %c0_i32_2 = arith.constant 0 : i32
    return %arg0, %c0_i32, %c0_i32_0, %c0_i32_1 : i32, i32, i32, i32
  }
}

</mosaic_0001>

<llo_original>
// kernel: tpu_custom_call.1
$region0: #{tpu_custom_call.1}
  #allocation0 [shape = 'u32[]', space=smem, size = 0x4, offset = 0x4, fixed_abs, tag = 'smem constant byte address 0x4 - core index']
  #allocation1 [shape = 'u32[144,128]{1,0:T(1,128)}', space=vmem, size = 0x12000, scoped, tag = 'internal scratch']
  %s0 = inlined_call_operand.vmem [shape: f32[4,14,22,4], index: 0, kind: input, shape index: {}]
  %s1 = inlined_call_operand.vmem [shape: f32[52,128], index: 1, kind: input, shape index: {}]
  %s2 = inlined_call_operand.vmem [shape: f32[1,128], index: 2, kind: input, shape index: {}]
  %s3 = inlined_call_operand.hbm [shape: f32[4,8,16,128], index: 3, kind: output, shape index: {}]
  %s4 = sld [smem:[#allocation0]]
  $region45: #{tpu_custom_call.1} parent=0
    _
  %s6 = ssub.s32 1, %s4
  %s7 = scalar_select 0, %s6, %s4
  $region1: #{tpu_custom_call.1} parent=0
    #allocation2 [shape = 'u8[131072]{0}', space=vmem, size = 0x20000, scoped, tag = 'output window, operand 0']
    #allocation3 [shape = 's32[2]{0}', space=sflag, size = 0x8, scoped, tag = 'scoped memory for tpu_custom_call.1']
    %8 = vsyncpa [#allocation3], 0
    %s9 = scalar_lea.sflag [#allocation3], 1
    %10 = vsyncpa %s9, 0
    loop: start=0, step=1, limit=6
    $region2: #{tpu_custom_call.1} parent=1 // loop_pre_header
      _
    $region3: #{tpu_custom_call.1} parent=1 // loop_header
      %s12 = sphi 0, %s16
      %p13 = scmp.ge.s32.totalorder %s12, 6
      %s22 = sphi 0, %s24
      %s25 = sphi 0, %s22
      %s26 = sphi 0, %s25
      %s42 = sphi 0, %s26
      %s46 = sphi 0, %s46
      %s48 = sphi 0, %s46
      %s49 = sphi 0, %s48
      %s63 = sphi 0, %s49
      %s67 = sphi 0, %s67
      %s69 = sphi 0, %s67
      %s70 = sphi 0, %s69
      %s84 = sphi 0, %s70
      %s90 = sphi 0, %s92
      %s93 = sphi 0, %s90
      %s94 = sphi 0, %s93
      %s110 = sphi 0, %s94
    $region4: #{tpu_custom_call.1} parent=1 // loop_header_branch
      %15 = sbr.rel (%p13) target = $region8
    $region5: #{tpu_custom_call.1} parent=1 // loop_body
      %s17 = ssub.s32 %s12, 1
      %s18 = ssub.s32 %s12, 2
      %s19 = sadd.s32 %s12, 1
      %s20 = ssub.s32 %s12, %s19
      %p21 = scmp.eq.s32.totalorder %s20, 0
      %s23 = sadd.s32 %s22, 1
      %s24 = scalar_select %p21, %s22, %s23
      %p27 = pneg %p21
      %p28 = scmp.eq.s32.totalorder %s12, 3
      %p29 = por %p27, %p28
      %p30 = scmp.ne.s32.totalorder %s22, %s25
      %p31 = scmp.eq.s32.totalorder %s12, 0
      %p32 = por %p30, %p31
      %p33 = scmp.ne.s32.totalorder %s22, %s25
      %p34 = scmp.eq.s32.totalorder %s17, 3
      %p35 = por %p33, %p34
      %p36 = scmp.ne.s32.totalorder %s25, %s26
      %p37 = scmp.eq.s32.totalorder %s17, 0
      %p38 = por %p36, %p37
      %p39 = scmp.ne.s32.totalorder %s25, %s26
      %p40 = scmp.eq.s32.totalorder %s18, 3
      %p41 = por %p39, %p40
      %p43 = scmp.ne.s32.totalorder %s26, %s42
      %p44 = scmp.eq.s32.totalorder %s18, 0
      %p45 = por %p43, %p44
      %s47 = sadd.s32 %s46, 1
      %p50 = scmp.eq.s32.totalorder %s12, 3
      %p51 = scmp.ne.s32.totalorder %s46, %s48
      %p52 = scmp.eq.s32.totalorder %s12, 0
      %p53 = por %p51, %p52
      %p54 = scmp.ne.s32.totalorder %s46, %s48
      %p55 = scmp.eq.s32.totalorder %s17, 3
      %p56 = por %p54, %p55
      %p57 = scmp.ne.s32.totalorder %s48, %s49
      %p58 = scmp.eq.s32.totalorder %s17, 0
      %p59 = por %p57, %p58
      %p60 = scmp.ne.s32.totalorder %s48, %s49
      %p61 = scmp.eq.s32.totalorder %s18, 3
      %p62 = por %p60, %p61
      %p64 = scmp.ne.s32.totalorder %s49, %s63
      %p65 = scmp.eq.s32.totalorder %s18, 0
      %p66 = por %p64, %p65
      %s68 = sadd.s32 %s67, 1
      %p71 = scmp.eq.s32.totalorder %s12, 3
      %p72 = scmp.ne.s32.totalorder %s67, %s69
      %p73 = scmp.eq.s32.totalorder %s12, 0
      %p74 = por %p72, %p73
      %p75 = scmp.ne.s32.totalorder %s67, %s69
      %p76 = scmp.eq.s32.totalorder %s17, 3
      %p77 = por %p75, %p76
      %p78 = scmp.ne.s32.totalorder %s69, %s70
      %p79 = scmp.eq.s32.totalorder %s17, 0
      %p80 = por %p78, %p79
      %p81 = scmp.ne.s32.totalorder %s69, %s70
      %p82 = scmp.eq.s32.totalorder %s18, 3
      %p83 = por %p81, %p82
      %p85 = scmp.ne.s32.totalorder %s70, %s84
      %p86 = scmp.eq.s32.totalorder %s18, 0
      %p87 = por %p85, %p86
      %s88 = ssub.s32 %s12, %s19
      %p89 = scmp.eq.s32.totalorder %s88, 0
      %s91 = sadd.s32 %s90, 1
      %s92 = scalar_select %p89, %s90, %s91
      %p95 = pneg %p89
      %p96 = scmp.eq.s32.totalorder %s12, 3
      %p97 = por %p95, %p96
      %p98 = scmp.ne.s32.totalorder %s90, %s93
      %p99 = scmp.eq.s32.totalorder %s12, 0
      %p100 = por %p98, %p99
      %p101 = scmp.ne.s32.totalorder %s90, %s93
      %p102 = scmp.eq.s32.totalorder %s17, 3
      %p103 = por %p101, %p102
      %p104 = scmp.ne.s32.totalorder %s93, %s94
      %p105 = scmp.eq.s32.totalorder %s17, 0
      %p106 = por %p104, %p105
      %p107 = scmp.ne.s32.totalorder %s93, %s94
      %p108 = scmp.eq.s32.totalorder %s18, 3
      %p109 = por %p107, %p108
      %p111 = scmp.ne.s32.totalorder %s94, %s110
      %p112 = scmp.eq.s32.totalorder %s18, 0
      %p113 = por %p111, %p112
      %p114 = scmp.le.s32.totalorder 1, %s12
      %p115 = scmp.lt.s32.totalorder %s12, 5
      %p116 = pnand %p114, %p115
      %p117 = pneg %p116
      // Predicated region
      $region9: #{tpu_custom_call.1} parent=5 // pred_check
        _
      $region10: #{tpu_custom_call.1} parent=5 // pred_check_branch
        %119 = sbr.rel (%p116) target = $region12
      $region11: #{tpu_custom_call.1} parent=5 // pred_region
        %s120 = ssub.s32 %s12, 1
        // Predicated region
        $region13: #{tpu_custom_call.1} parent=11 // pred_check
          %p121 = pneg %p59
        $region14: #{tpu_custom_call.1} parent=11 // pred_check_branch
          %123 = sbr.rel (%p121) target = $region16
        $region15: #{tpu_custom_call.1} parent=11 // pred_region
          _
        $region16: #{tpu_custom_call.1} parent=11 // pred_fallthru
          _
        // Predicated region
        $region17: #{tpu_custom_call.1} parent=11 // pred_check
          %p124 = pneg %p80
        $region18: #{tpu_custom_call.1} parent=11 // pred_check_branch
          %126 = sbr.rel (%p124) target = $region20
        $region19: #{tpu_custom_call.1} parent=11 // pred_region
          _
        $region20: #{tpu_custom_call.1} parent=11 // pred_fallthru
          _
      $region12: #{tpu_custom_call.1} parent=5 // pred_fallthru
        _
      %p127 = scmp.lt.s32.totalorder %s12, 4
      // Predicated region
      $region21: #{tpu_custom_call.1} parent=5 // pred_check
        %p128 = pneg %p127
      $region22: #{tpu_custom_call.1} parent=5 // pred_check_branch
        %130 = sbr.rel (%p128) target = $region24
      $region23: #{tpu_custom_call.1} parent=5 // pred_region
        // Predicated region
        $region25: #{tpu_custom_call.1} parent=23 // pred_check
          %p131 = pneg %p32
        $region26: #{tpu_custom_call.1} parent=23 // pred_check_branch
          %133 = sbr.rel (%p131) target = $region28
        $region27: #{tpu_custom_call.1} parent=23 // pred_region
          %p134 = scmp.lt.s32.totalorder %s12, 3
          %s135 = scalar_select %p134, %s12, 3
          %s136 = smul.addr %s135, 42
          %s137 = smul.addr %s136, 8
          %s138 = scalar_lea.vmem %s0, %s137
        $region28: #{tpu_custom_call.1} parent=23 // pred_fallthru
          _
      $region24: #{tpu_custom_call.1} parent=5 // pred_fallthru
        _
      %p139 = scmp.le.s32.totalorder 1, %s12
      %p140 = scmp.lt.s32.totalorder %s12, 5
      %p141 = pnand %p139, %p140
      %p142 = pneg %p141
      // Predicated region
      $region29: #{tpu_custom_call.1} parent=5 // pred_check
        _
      $region30: #{tpu_custom_call.1} parent=5 // pred_check_branch
        %144 = sbr.rel (%p141) target = $region32
      $region31: #{tpu_custom_call.1} parent=5 // pred_region
        %s145 = ssub.s32 %s12, 1
        %p146 = scmp.lt.s32.totalorder %s17, 3
        %s147 = scalar_select %p146, %s17, 3
        %s148 = smul.addr %s147, 42
        %s149 = smul.addr %s148, 8
        %s150 = scalar_lea.vmem %s0, %s149
        %p151 = pneg %p38
        %p152 = pneg %p35
        %p153 = pneg %p59
        %p154 = pneg %p56
        %p155 = pneg %p80
        %p156 = pneg %p77
        %p157 = pneg %p106
        %p158 = pneg %p103
        %s159 = sand.u32 %s93, 1
        %s160 = scalar_lea.sflag [#allocation3], %s159
        %s161 = sand.u32 %s93, 1
        %s162 = smul.addr %s161, 128
        %s163 = scalar_lea.vmem [#allocation2], %s162
        %p164 = scmp.lt.s32.totalorder %s17, 3
        %s165 = scalar_select %p164, %s17, 3
        %s166 = smul.addr %s165, 42
        %s167 = smul.addr %s166, 8
        %s168 = scalar_lea.vmem %s0, %s167
        %s169 = scalar_lea.vmem %s168, 72
        %v170 = vld [vmem:[%s169 + $0x3] sm:$0xff]
        %v171 = vld [vmem:[%s169 + $0xb] sm:$0xff]
        %v172 = vld [vmem:[%s169 + $0x1b] sm:$0xff]
        %v173 = vld [vmem:[%s169 + $0x23] sm:$0xff]
        %v174 = vld [vmem:[%s169 + $0x33] sm:$0xff]
        %v175 = vld [vmem:[%s169 + $0x3b] sm:$0xff]
        %v176 = vld [vmem:[%s169 + $0x4b] sm:$0xff]
        %v177 = vld [vmem:[%s169 + $0x53] sm:$0xff]
        %v178 = vld [vmem:[%s169 + $0x63] sm:$0xff]
        %v179 = vld [vmem:[%s169 + $0x6b] sm:$0xff]
        %v180 = vld [vmem:[%s169 + $0x7b] sm:$0xff]
        %v181 = vld [vmem:[%s169 + $0x83] sm:$0xff]
        %v182 = vld [vmem:[%s169 + $0x93] sm:$0xff]
        %v183 = vld [vmem:[%s169 + $0x9b] sm:$0xff]
        %v184 = vld [vmem:[%s169 + $0xab] sm:$0xff]
        %v185 = vld [vmem:[%s169 + $0xb3] sm:$0xff]
        %v186 = vld [vmem:[%s169 + $0x2] sm:$0xff]
        %v187 = vld [vmem:[%s169 + $0xa] sm:$0xff]
        %v188 = vld [vmem:[%s169 + $0x1a] sm:$0xff]
        %v189 = vld [vmem:[%s169 + $0x22] sm:$0xff]
        %v190 = vld [vmem:[%s169 + $0x32] sm:$0xff]
        %v191 = vld [vmem:[%s169 + $0x3a] sm:$0xff]
        %v192 = vld [vmem:[%s169 + $0x4a] sm:$0xff]
        %v193 = vld [vmem:[%s169 + $0x52] sm:$0xff]
        %v194 = vld [vmem:[%s169 + $0x62] sm:$0xff]
        %v195 = vld [vmem:[%s169 + $0x6a] sm:$0xff]
        %v196 = vld [vmem:[%s169 + $0x7a] sm:$0xff]
        %v197 = vld [vmem:[%s169 + $0x82] sm:$0xff]
        %v198 = vld [vmem:[%s169 + $0x92] sm:$0xff]
        %v199 = vld [vmem:[%s169 + $0x9a] sm:$0xff]
        %v200 = vld [vmem:[%s169 + $0xaa] sm:$0xff]
        %v201 = vld [vmem:[%s169 + $0xb2] sm:$0xff]
        %v202 = vld [vmem:[%s169 + $0x4] sm:$0xff]
        %v203 = vld [vmem:[%s169 + $0xc] sm:$0xff]
        %v204 = vld [vmem:[%s169 + $0x1c] sm:$0xff]
        %v205 = vld [vmem:[%s169 + $0x24] sm:$0xff]
        %v206 = vld [vmem:[%s169 + $0x34] sm:$0xff]
        %v207 = vld [vmem:[%s169 + $0x3c] sm:$0xff]
        %v208 = vld [vmem:[%s169 + $0x4c] sm:$0xff]
        %v209 = vld [vmem:[%s169 + $0x54] sm:$0xff]
        %v210 = vld [vmem:[%s169 + $0x64] sm:$0xff]
        %v211 = vld [vmem:[%s169 + $0x6c] sm:$0xff]
        %v212 = vld [vmem:[%s169 + $0x7c] sm:$0xff]
        %v213 = vld [vmem:[%s169 + $0x84] sm:$0xff]
        %v214 = vld [vmem:[%s169 + $0x94] sm:$0xff]
        %v215 = vld [vmem:[%s169 + $0x9c] sm:$0xff]
        %v216 = vld [vmem:[%s169 + $0xac] sm:$0xff]
        %v217 = vld [vmem:[%s169 + $0xb4] sm:$0xff]
        %s218 = scalar_lea.vmem %s168, 48
        %v219 = vld [vmem:[%s218 + $0x3] sm:$0xff]
        %v220 = vld [vmem:[%s218 + $0xb] sm:$0xff]
        %v221 = vld [vmem:[%s218 + $0x1b] sm:$0xff]
        %v222 = vld [vmem:[%s218 + $0x23] sm:$0xff]
        %v223 = vld [vmem:[%s218 + $0x33] sm:$0xff]
        %v224 = vld [vmem:[%s218 + $0x3b] sm:$0xff]
        %v225 = vld [vmem:[%s218 + $0x4b] sm:$0xff]
        %v226 = vld [vmem:[%s218 + $0x53] sm:$0xff]
        %v227 = vld [vmem:[%s218 + $0x63] sm:$0xff]
        %v228 = vld [vmem:[%s218 + $0x6b] sm:$0xff]
        %v229 = vld [vmem:[%s218 + $0x7b] sm:$0xff]
        %v230 = vld [vmem:[%s218 + $0x83] sm:$0xff]
        %v231 = vld [vmem:[%s218 + $0x93] sm:$0xff]
        %v232 = vld [vmem:[%s218 + $0x9b] sm:$0xff]
        %v233 = vld [vmem:[%s218 + $0xab] sm:$0xff]
        %v234 = vld [vmem:[%s218 + $0xb3] sm:$0xff]
        %s235 = scalar_lea.vmem %s168, 96
        %v236 = vld [vmem:[%s235 + $0x3] sm:$0xff]
        %v237 = vld [vmem:[%s235 + $0xb] sm:$0xff]
        %v238 = vld [vmem:[%s235 + $0x1b] sm:$0xff]
        %v239 = vld [vmem:[%s235 + $0x23] sm:$0xff]
        %v240 = vld [vmem:[%s235 + $0x33] sm:$0xff]
        %v241 = vld [vmem:[%s235 + $0x3b] sm:$0xff]
        %v242 = vld [vmem:[%s235 + $0x4b] sm:$0xff]
        %v243 = vld [vmem:[%s235 + $0x53] sm:$0xff]
        %v244 = vld [vmem:[%s235 + $0x63] sm:$0xff]
        %v245 = vld [vmem:[%s235 + $0x6b] sm:$0xff]
        %v246 = vld [vmem:[%s235 + $0x7b] sm:$0xff]
        %v247 = vld [vmem:[%s235 + $0x83] sm:$0xff]
        %v248 = vld [vmem:[%s235 + $0x93] sm:$0xff]
        %v249 = vld [vmem:[%s235 + $0x9b] sm:$0xff]
        %v250 = vld [vmem:[%s235 + $0xab] sm:$0xff]
        %v251 = vld [vmem:[%s235 + $0xb3] sm:$0xff]
        %v252 = vld [vmem:[%s169 + $0x1] sm:$0xff]
        %v253 = vld [vmem:[%s169 + $0x9] sm:$0xff]
        %v254 = vld [vmem:[%s169 + $0x19] sm:$0xff]
        %v255 = vld [vmem:[%s169 + $0x21] sm:$0xff]
        %v256 = vld [vmem:[%s169 + $0x31] sm:$0xff]
        %v257 = vld [vmem:[%s169 + $0x39] sm:$0xff]
        %v258 = vld [vmem:[%s169 + $0x49] sm:$0xff]
        %v259 = vld [vmem:[%s169 + $0x51] sm:$0xff]
        %v260 = vld [vmem:[%s169 + $0x61] sm:$0xff]
        %v261 = vld [vmem:[%s169 + $0x69] sm:$0xff]
        %v262 = vld [vmem:[%s169 + $0x79] sm:$0xff]
        %v263 = vld [vmem:[%s169 + $0x81] sm:$0xff]
        %v264 = vld [vmem:[%s169 + $0x91] sm:$0xff]
        %v265 = vld [vmem:[%s169 + $0x99] sm:$0xff]
        %v266 = vld [vmem:[%s169 + $0xa9] sm:$0xff]
        %v267 = vld [vmem:[%s169 + $0xb1] sm:$0xff]
        %v268 = vld [vmem:[%s169 + $0x5] sm:$0xff]
        %v269 = vld [vmem:[%s169 + $0xd] sm:$0xff]
        %v270 = vld [vmem:[%s169 + $0x1d] sm:$0xff]
        %v271 = vld [vmem:[%s169 + $0x25] sm:$0xff]
        %v272 = vld [vmem:[%s169 + $0x35] sm:$0xff]
        %v273 = vld [vmem:[%s169 + $0x3d] sm:$0xff]
        %v274 = vld [vmem:[%s169 + $0x4d] sm:$0xff]
        %v275 = vld [vmem:[%s169 + $0x55] sm:$0xff]
        %v276 = vld [vmem:[%s169 + $0x65] sm:$0xff]
        %v277 = vld [vmem:[%s169 + $0x6d] sm:$0xff]
        %v278 = vld [vmem:[%s169 + $0x7d] sm:$0xff]
        %v279 = vld [vmem:[%s169 + $0x85] sm:$0xff]
        %v280 = vld [vmem:[%s169 + $0x95] sm:$0xff]
        %v281 = vld [vmem:[%s169 + $0x9d] sm:$0xff]
        %v282 = vld [vmem:[%s169 + $0xad] sm:$0xff]
        %v283 = vld [vmem:[%s169 + $0xb5] sm:$0xff]
        %s284 = scalar_lea.vmem %s168, 24
        %v285 = vld [vmem:[%s284 + $0x3] sm:$0xff]
        %v286 = vld [vmem:[%s284 + $0xb] sm:$0xff]
        %v287 = vld [vmem:[%s284 + $0x1b] sm:$0xff]
        %v288 = vld [vmem:[%s284 + $0x23] sm:$0xff]
        %v289 = vld [vmem:[%s284 + $0x33] sm:$0xff]
        %v290 = vld [vmem:[%s284 + $0x3b] sm:$0xff]
        %v291 = vld [vmem:[%s284 + $0x4b] sm:$0xff]
        %v292 = vld [vmem:[%s284 + $0x53] sm:$0xff]
        %v293 = vld [vmem:[%s284 + $0x63] sm:$0xff]
        %v294 = vld [vmem:[%s284 + $0x6b] sm:$0xff]
        %v295 = vld [vmem:[%s284 + $0x7b] sm:$0xff]
        %v296 = vld [vmem:[%s284 + $0x83] sm:$0xff]
        %v297 = vld [vmem:[%s284 + $0x93] sm:$0xff]
        %v298 = vld [vmem:[%s284 + $0x9b] sm:$0xff]
        %v299 = vld [vmem:[%s284 + $0xab] sm:$0xff]
        %v300 = vld [vmem:[%s284 + $0xb3] sm:$0xff]
        %s301 = scalar_lea.vmem %s168, 120
        %v302 = vld [vmem:[%s301 + $0x3] sm:$0xff]
        %v303 = vld [vmem:[%s301 + $0xb] sm:$0xff]
        %v304 = vld [vmem:[%s301 + $0x1b] sm:$0xff]
        %v305 = vld [vmem:[%s301 + $0x23] sm:$0xff]
        %v306 = vld [vmem:[%s301 + $0x33] sm:$0xff]
        %v307 = vld [vmem:[%s301 + $0x3b] sm:$0xff]
        %v308 = vld [vmem:[%s301 + $0x4b] sm:$0xff]
        %v309 = vld [vmem:[%s301 + $0x53] sm:$0xff]
        %v310 = vld [vmem:[%s301 + $0x63] sm:$0xff]
        %v311 = vld [vmem:[%s301 + $0x6b] sm:$0xff]
        %v312 = vld [vmem:[%s301 + $0x7b] sm:$0xff]
        %v313 = vld [vmem:[%s301 + $0x83] sm:$0xff]
        %v314 = vld [vmem:[%s301 + $0x93] sm:$0xff]
        %v315 = vld [vmem:[%s301 + $0x9b] sm:$0xff]
        %v316 = vld [vmem:[%s301 + $0xab] sm:$0xff]
        %v317 = vld [vmem:[%s301 + $0xb3] sm:$0xff]
        %v318 = vld [vmem:[%s169] sm:$0xff]
        %v319 = vld [vmem:[%s169 + $0x8] sm:$0xff]
        %v320 = vld [vmem:[%s169 + $0x18] sm:$0xff]
        %v321 = vld [vmem:[%s169 + $0x20] sm:$0xff]
        %v322 = vld [vmem:[%s169 + $0x30] sm:$0xff]
        %v323 = vld [vmem:[%s169 + $0x38] sm:$0xff]
        %v324 = vld [vmem:[%s169 + $0x48] sm:$0xff]
        %v325 = vld [vmem:[%s169 + $0x50] sm:$0xff]
        %v326 = vld [vmem:[%s169 + $0x60] sm:$0xff]
        %v327 = vld [vmem:[%s169 + $0x68] sm:$0xff]
        %v328 = vld [vmem:[%s169 + $0x78] sm:$0xff]
        %v329 = vld [vmem:[%s169 + $0x80] sm:$0xff]
        %v330 = vld [vmem:[%s169 + $0x90] sm:$0xff]
        %v331 = vld [vmem:[%s169 + $0x98] sm:$0xff]
        %v332 = vld [vmem:[%s169 + $0xa8] sm:$0xff]
        %v333 = vld [vmem:[%s169 + $0xb0] sm:$0xff]
        %v334 = vld [vmem:[%s169 + $0x6] sm:$0xff]
        %v335 = vld [vmem:[%s169 + $0xe] sm:$0xff]
        %v336 = vld [vmem:[%s169 + $0x1e] sm:$0xff]
        %v337 = vld [vmem:[%s169 + $0x26] sm:$0xff]
        %v338 = vld [vmem:[%s169 + $0x36] sm:$0xff]
        %v339 = vld [vmem:[%s169 + $0x3e] sm:$0xff]
        %v340 = vld [vmem:[%s169 + $0x4e] sm:$0xff]
        %v341 = vld [vmem:[%s169 + $0x56] sm:$0xff]
        %v342 = vld [vmem:[%s169 + $0x66] sm:$0xff]
        %v343 = vld [vmem:[%s169 + $0x6e] sm:$0xff]
        %v344 = vld [vmem:[%s169 + $0x7e] sm:$0xff]
        %v345 = vld [vmem:[%s169 + $0x86] sm:$0xff]
        %v346 = vld [vmem:[%s169 + $0x96] sm:$0xff]
        %v347 = vld [vmem:[%s169 + $0x9e] sm:$0xff]
        %v348 = vld [vmem:[%s169 + $0xae] sm:$0xff]
        %v349 = vld [vmem:[%s169 + $0xb6] sm:$0xff]
        %v350 = vld [vmem:[%s168 + $0x3] sm:$0xff]
        %v351 = vld [vmem:[%s168 + $0xb] sm:$0xff]
        %v352 = vld [vmem:[%s168 + $0x1b] sm:$0xff]
        %v353 = vld [vmem:[%s168 + $0x23] sm:$0xff]
        %v354 = vld [vmem:[%s168 + $0x33] sm:$0xff]
        %v355 = vld [vmem:[%s168 + $0x3b] sm:$0xff]
        %v356 = vld [vmem:[%s168 + $0x4b] sm:$0xff]
        %v357 = vld [vmem:[%s168 + $0x53] sm:$0xff]
        %v358 = vld [vmem:[%s168 + $0x63] sm:$0xff]
        %v359 = vld [vmem:[%s168 + $0x6b] sm:$0xff]
        %v360 = vld [vmem:[%s168 + $0x7b] sm:$0xff]
        %v361 = vld [vmem:[%s168 + $0x83] sm:$0xff]
        %v362 = vld [vmem:[%s168 + $0x93] sm:$0xff]
        %v363 = vld [vmem:[%s168 + $0x9b] sm:$0xff]
        %v364 = vld [vmem:[%s168 + $0xab] sm:$0xff]
        %v365 = vld [vmem:[%s168 + $0xb3] sm:$0xff]
        %s366 = scalar_lea.vmem %s168, 144
        %v367 = vld [vmem:[%s366 + $0x3] sm:$0xff]
        %v368 = vld [vmem:[%s366 + $0xb] sm:$0xff]
        %v369 = vld [vmem:[%s366 + $0x1b] sm:$0xff]
        %v370 = vld [vmem:[%s366 + $0x23] sm:$0xff]
        %v371 = vld [vmem:[%s366 + $0x33] sm:$0xff]
        %v372 = vld [vmem:[%s366 + $0x3b] sm:$0xff]
        %v373 = vld [vmem:[%s366 + $0x4b] sm:$0xff]
        %v374 = vld [vmem:[%s366 + $0x53] sm:$0xff]
        %v375 = vld [vmem:[%s366 + $0x63] sm:$0xff]
        %v376 = vld [vmem:[%s366 + $0x6b] sm:$0xff]
        %v377 = vld [vmem:[%s366 + $0x7b] sm:$0xff]
        %v378 = vld [vmem:[%s366 + $0x83] sm:$0xff]
        %v379 = vld [vmem:[%s366 + $0x93] sm:$0xff]
        %v380 = vld [vmem:[%s366 + $0x9b] sm:$0xff]
        %v381 = vld [vmem:[%s366 + $0xab] sm:$0xff]
        %v382 = vld [vmem:[%s366 + $0xb3] sm:$0xff]
        %399 = vrot.lane.b32.xlu0 %v186, 4
        %v400 = vpop.permute.xlu0 %399
        %401 = vrot.lane.b32.xlu0 %v187, 4
        %v402 = vpop.permute.xlu0 %401
        %403 = vrot.lane.b32.xlu0 %v188, 4
        %v404 = vpop.permute.xlu0 %403
        %405 = vrot.lane.b32.xlu0 %v189, 4
        %v406 = vpop.permute.xlu0 %405
        %407 = vrot.lane.b32.xlu0 %v190, 4
        %v408 = vpop.permute.xlu0 %407
        %409 = vrot.lane.b32.xlu0 %v191, 4
        %v410 = vpop.permute.xlu0 %409
        %411 = vrot.lane.b32.xlu0 %v192, 4
        %v412 = vpop.permute.xlu0 %411
        %413 = vrot.lane.b32.xlu0 %v193, 4
        %v414 = vpop.permute.xlu0 %413
        %415 = vrot.lane.b32.xlu0 %v194, 4
        %v416 = vpop.permute.xlu0 %415
        %417 = vrot.lane.b32.xlu0 %v195, 4
        %v418 = vpop.permute.xlu0 %417
        %419 = vrot.lane.b32.xlu0 %v196, 4
        %v420 = vpop.permute.xlu0 %419
        %421 = vrot.lane.b32.xlu0 %v197, 4
        %v422 = vpop.permute.xlu0 %421
        %423 = vrot.lane.b32.xlu0 %v198, 4
        %v424 = vpop.permute.xlu0 %423
        %425 = vrot.lane.b32.xlu0 %v199, 4
        %v426 = vpop.permute.xlu0 %425
        %427 = vrot.lane.b32.xlu0 %v200, 4
        %v428 = vpop.permute.xlu0 %427
        %429 = vrot.lane.b32.xlu0 %v201, 4
        %v430 = vpop.permute.xlu0 %429
        %463 = vrot.lane.b32.xlu0 %v202, 8
        %v464 = vpop.permute.xlu0 %463
        %465 = vrot.lane.b32.xlu0 %v203, 8
        %v466 = vpop.permute.xlu0 %465
        %467 = vrot.lane.b32.xlu0 %v204, 8
        %v468 = vpop.permute.xlu0 %467
        %469 = vrot.lane.b32.xlu0 %v205, 8
        %v470 = vpop.permute.xlu0 %469
        %471 = vrot.lane.b32.xlu0 %v206, 8
        %v472 = vpop.permute.xlu0 %471
        %473 = vrot.lane.b32.xlu0 %v207, 8
        %v474 = vpop.permute.xlu0 %473
        %475 = vrot.lane.b32.xlu0 %v208, 8
        %v476 = vpop.permute.xlu0 %475
        %477 = vrot.lane.b32.xlu0 %v209, 8
        %v478 = vpop.permute.xlu0 %477
        %479 = vrot.lane.b32.xlu0 %v210, 8
        %v480 = vpop.permute.xlu0 %479
        %481 = vrot.lane.b32.xlu0 %v211, 8
        %v482 = vpop.permute.xlu0 %481
        %483 = vrot.lane.b32.xlu0 %v212, 8
        %v484 = vpop.permute.xlu0 %483
        %485 = vrot.lane.b32.xlu0 %v213, 8
        %v486 = vpop.permute.xlu0 %485
        %487 = vrot.lane.b32.xlu0 %v214, 8
        %v488 = vpop.permute.xlu0 %487
        %489 = vrot.lane.b32.xlu0 %v215, 8
        %v490 = vpop.permute.xlu0 %489
        %491 = vrot.lane.b32.xlu0 %v216, 8
        %v492 = vpop.permute.xlu0 %491
        %493 = vrot.lane.b32.xlu0 %v217, 8
        %v494 = vpop.permute.xlu0 %493
        %527 = vrot.lane.b32.xlu0 %v219, 12
        %v528 = vpop.permute.xlu0 %527
        %529 = vrot.lane.b32.xlu0 %v220, 12
        %v530 = vpop.permute.xlu0 %529
        %531 = vrot.lane.b32.xlu0 %v221, 12
        %v532 = vpop.permute.xlu0 %531
        %533 = vrot.lane.b32.xlu0 %v222, 12
        %v534 = vpop.permute.xlu0 %533
        %535 = vrot.lane.b32.xlu0 %v223, 12
        %v536 = vpop.permute.xlu0 %535
        %537 = vrot.lane.b32.xlu0 %v224, 12
        %v538 = vpop.permute.xlu0 %537
        %539 = vrot.lane.b32.xlu0 %v225, 12
        %v540 = vpop.permute.xlu0 %539
        %541 = vrot.lane.b32.xlu0 %v226, 12
        %v542 = vpop.permute.xlu0 %541
        %543 = vrot.lane.b32.xlu0 %v227, 12
        %v544 = vpop.permute.xlu0 %543
        %545 = vrot.lane.b32.xlu0 %v228, 12
        %v546 = vpop.permute.xlu0 %545
        %547 = vrot.lane.b32.xlu0 %v229, 12
        %v548 = vpop.permute.xlu0 %547
        %549 = vrot.lane.b32.xlu0 %v230, 12
        %v550 = vpop.permute.xlu0 %549
        %551 = vrot.lane.b32.xlu0 %v231, 12
        %v552 = vpop.permute.xlu0 %551
        %553 = vrot.lane.b32.xlu0 %v232, 12
        %v554 = vpop.permute.xlu0 %553
        %555 = vrot.lane.b32.xlu0 %v233, 12
        %v556 = vpop.permute.xlu0 %555
        %557 = vrot.lane.b32.xlu0 %v234, 12
        %v558 = vpop.permute.xlu0 %557
        %591 = vrot.lane.b32.xlu0 %v236, 16
        %v592 = vpop.permute.xlu0 %591
        %593 = vrot.lane.b32.xlu0 %v237, 16
        %v594 = vpop.permute.xlu0 %593
        %595 = vrot.lane.b32.xlu0 %v238, 16
        %v596 = vpop.permute.xlu0 %595
        %597 = vrot.lane.b32.xlu0 %v239, 16
        %v598 = vpop.permute.xlu0 %597
        %599 = vrot.lane.b32.xlu0 %v240, 16
        %v600 = vpop.permute.xlu0 %599
        %601 = vrot.lane.b32.xlu0 %v241, 16
        %v602 = vpop.permute.xlu0 %601
        %603 = vrot.lane.b32.xlu0 %v242, 16
        %v604 = vpop.permute.xlu0 %603
        %605 = vrot.lane.b32.xlu0 %v243, 16
        %v606 = vpop.permute.xlu0 %605
        %607 = vrot.lane.b32.xlu0 %v244, 16
        %v608 = vpop.permute.xlu0 %607
        %609 = vrot.lane.b32.xlu0 %v245, 16
        %v610 = vpop.permute.xlu0 %609
        %611 = vrot.lane.b32.xlu0 %v246, 16
        %v612 = vpop.permute.xlu0 %611
        %613 = vrot.lane.b32.xlu0 %v247, 16
        %v614 = vpop.permute.xlu0 %613
        %615 = vrot.lane.b32.xlu0 %v248, 16
        %v616 = vpop.permute.xlu0 %615
        %617 = vrot.lane.b32.xlu0 %v249, 16
        %v618 = vpop.permute.xlu0 %617
        %619 = vrot.lane.b32.xlu0 %v250, 16
        %v620 = vpop.permute.xlu0 %619
        %621 = vrot.lane.b32.xlu0 %v251, 16
        %v622 = vpop.permute.xlu0 %621
        %655 = vrot.lane.b32.xlu0 %v252, 20
        %v656 = vpop.permute.xlu0 %655
        %657 = vrot.lane.b32.xlu0 %v253, 20
        %v658 = vpop.permute.xlu0 %657
        %659 = vrot.lane.b32.xlu0 %v254, 20
        %v660 = vpop.permute.xlu0 %659
        %661 = vrot.lane.b32.xlu0 %v255, 20
        %v662 = vpop.permute.xlu0 %661
        %663 = vrot.lane.b32.xlu0 %v256, 20
        %v664 = vpop.permute.xlu0 %663
        %665 = vrot.lane.b32.xlu0 %v257, 20
        %v666 = vpop.permute.xlu0 %665
        %667 = vrot.lane.b32.xlu0 %v258, 20
        %v668 = vpop.permute.xlu0 %667
        %669 = vrot.lane.b32.xlu0 %v259, 20
        %v670 = vpop.permute.xlu0 %669
        %671 = vrot.lane.b32.xlu0 %v260, 20
        %v672 = vpop.permute.xlu0 %671
        %673 = vrot.lane.b32.xlu0 %v261, 20
        %v674 = vpop.permute.xlu0 %673
        %675 = vrot.lane.b32.xlu0 %v262, 20
        %v676 = vpop.permute.xlu0 %675
        %677 = vrot.lane.b32.xlu0 %v263, 20
        %v678 = vpop.permute.xlu0 %677
        %679 = vrot.lane.b32.xlu0 %v264, 20
        %v680 = vpop.permute.xlu0 %679
        %681 = vrot.lane.b32.xlu0 %v265, 20
        %v682 = vpop.permute.xlu0 %681
        %683 = vrot.lane.b32.xlu0 %v266, 20
        %v684 = vpop.permute.xlu0 %683
        %685 = vrot.lane.b32.xlu0 %v267, 20
        %v686 = vpop.permute.xlu0 %685
        %719 = vrot.lane.b32.xlu0 %v268, 24
        %v720 = vpop.permute.xlu0 %719
        %721 = vrot.lane.b32.xlu0 %v269, 24
        %v722 = vpop.permute.xlu0 %721
        %723 = vrot.lane.b32.xlu0 %v270, 24
        %v724 = vpop.permute.xlu0 %723
        %725 = vrot.lane.b32.xlu0 %v271, 24
        %v726 = vpop.permute.xlu0 %725
        %727 = vrot.lane.b32.xlu0 %v272, 24
        %v728 = vpop.permute.xlu0 %727
        %729 = vrot.lane.b32.xlu0 %v273, 24
        %v730 = vpop.permute.xlu0 %729
        %731 = vrot.lane.b32.xlu0 %v274, 24
        %v732 = vpop.permute.xlu0 %731
        %733 = vrot.lane.b32.xlu0 %v275, 24
        %v734 = vpop.permute.xlu0 %733
        %735 = vrot.lane.b32.xlu0 %v276, 24
        %v736 = vpop.permute.xlu0 %735
        %737 = vrot.lane.b32.xlu0 %v277, 24
        %v738 = vpop.permute.xlu0 %737
        %739 = vrot.lane.b32.xlu0 %v278, 24
        %v740 = vpop.permute.xlu0 %739
        %741 = vrot.lane.b32.xlu0 %v279, 24
        %v742 = vpop.permute.xlu0 %741
        %743 = vrot.lane.b32.xlu0 %v280, 24
        %v744 = vpop.permute.xlu0 %743
        %745 = vrot.lane.b32.xlu0 %v281, 24
        %v746 = vpop.permute.xlu0 %745
        %747 = vrot.lane.b32.xlu0 %v282, 24
        %v748 = vpop.permute.xlu0 %747
        %749 = vrot.lane.b32.xlu0 %v283, 24
        %v750 = vpop.permute.xlu0 %749
        %783 = vrot.lane.b32.xlu0 %v285, 28
        %v784 = vpop.permute.xlu0 %783
        %785 = vrot.lane.b32.xlu0 %v286, 28
        %v786 = vpop.permute.xlu0 %785
        %787 = vrot.lane.b32.xlu0 %v287, 28
        %v788 = vpop.permute.xlu0 %787
        %789 = vrot.lane.b32.xlu0 %v288, 28
        %v790 = vpop.permute.xlu0 %789
        %791 = vrot.lane.b32.xlu0 %v289, 28
        %v792 = vpop.permute.xlu0 %791
        %793 = vrot.lane.b32.xlu0 %v290, 28
        %v794 = vpop.permute.xlu0 %793
        %795 = vrot.lane.b32.xlu0 %v291, 28
        %v796 = vpop.permute.xlu0 %795
        %797 = vrot.lane.b32.xlu0 %v292, 28
        %v798 = vpop.permute.xlu0 %797
        %799 = vrot.lane.b32.xlu0 %v293, 28
        %v800 = vpop.permute.xlu0 %799
        %801 = vrot.lane.b32.xlu0 %v294, 28
        %v802 = vpop.permute.xlu0 %801
        %803 = vrot.lane.b32.xlu0 %v295, 28
        %v804 = vpop.permute.xlu0 %803
        %805 = vrot.lane.b32.xlu0 %v296, 28
        %v806 = vpop.permute.xlu0 %805
        %807 = vrot.lane.b32.xlu0 %v297, 28
        %v808 = vpop.permute.xlu0 %807
        %809 = vrot.lane.b32.xlu0 %v298, 28
        %v810 = vpop.permute.xlu0 %809
        %811 = vrot.lane.b32.xlu0 %v299, 28
        %v812 = vpop.permute.xlu0 %811
        %813 = vrot.lane.b32.xlu0 %v300, 28
        %v814 = vpop.permute.xlu0 %813
        %847 = vrot.lane.b32.xlu0 %v302, 32
        %v848 = vpop.permute.xlu0 %847
        %849 = vrot.lane.b32.xlu0 %v303, 32
        %v850 = vpop.permute.xlu0 %849
        %851 = vrot.lane.b32.xlu0 %v304, 32
        %v852 = vpop.permute.xlu0 %851
        %853 = vrot.lane.b32.xlu0 %v305, 32
        %v854 = vpop.permute.xlu0 %853
        %855 = vrot.lane.b32.xlu0 %v306, 32
        %v856 = vpop.permute.xlu0 %855
        %857 = vrot.lane.b32.xlu0 %v307, 32
        %v858 = vpop.permute.xlu0 %857
        %859 = vrot.lane.b32.xlu0 %v308, 32
        %v860 = vpop.permute.xlu0 %859
        %861 = vrot.lane.b32.xlu0 %v309, 32
        %v862 = vpop.permute.xlu0 %861
        %863 = vrot.lane.b32.xlu0 %v310, 32
        %v864 = vpop.permute.xlu0 %863
        %865 = vrot.lane.b32.xlu0 %v311, 32
        %v866 = vpop.permute.xlu0 %865
        %867 = vrot.lane.b32.xlu0 %v312, 32
        %v868 = vpop.permute.xlu0 %867
        %869 = vrot.lane.b32.xlu0 %v313, 32
        %v870 = vpop.permute.xlu0 %869
        %871 = vrot.lane.b32.xlu0 %v314, 32
        %v872 = vpop.permute.xlu0 %871
        %873 = vrot.lane.b32.xlu0 %v315, 32
        %v874 = vpop.permute.xlu0 %873
        %875 = vrot.lane.b32.xlu0 %v316, 32
        %v876 = vpop.permute.xlu0 %875
        %877 = vrot.lane.b32.xlu0 %v317, 32
        %v878 = vpop.permute.xlu0 %877
        %911 = vrot.lane.b32.xlu0 %v318, 36
        %v912 = vpop.permute.xlu0 %911
        %913 = vrot.lane.b32.xlu0 %v319, 36
        %v914 = vpop.permute.xlu0 %913
        %915 = vrot.lane.b32.xlu0 %v320, 36
        %v916 = vpop.permute.xlu0 %915
        %917 = vrot.lane.b32.xlu0 %v321, 36
        %v918 = vpop.permute.xlu0 %917
        %919 = vrot.lane.b32.xlu0 %v322, 36
        %v920 = vpop.permute.xlu0 %919
        %921 = vrot.lane.b32.xlu0 %v323, 36
        %v922 = vpop.permute.xlu0 %921
        %923 = vrot.lane.b32.xlu0 %v324, 36
        %v924 = vpop.permute.xlu0 %923
        %925 = vrot.lane.b32.xlu0 %v325, 36
        %v926 = vpop.permute.xlu0 %925
        %927 = vrot.lane.b32.xlu0 %v326, 36
        %v928 = vpop.permute.xlu0 %927
        %929 = vrot.lane.b32.xlu0 %v327, 36
        %v930 = vpop.permute.xlu0 %929
        %931 = vrot.lane.b32.xlu0 %v328, 36
        %v932 = vpop.permute.xlu0 %931
        %933 = vrot.lane.b32.xlu0 %v329, 36
        %v934 = vpop.permute.xlu0 %933
        %935 = vrot.lane.b32.xlu0 %v330, 36
        %v936 = vpop.permute.xlu0 %935
        %937 = vrot.lane.b32.xlu0 %v331, 36
        %v938 = vpop.permute.xlu0 %937
        %939 = vrot.lane.b32.xlu0 %v332, 36
        %v940 = vpop.permute.xlu0 %939
        %941 = vrot.lane.b32.xlu0 %v333, 36
        %v942 = vpop.permute.xlu0 %941
        %975 = vrot.lane.b32.xlu0 %v334, 40
        %v976 = vpop.permute.xlu0 %975
        %977 = vrot.lane.b32.xlu0 %v335, 40
        %v978 = vpop.permute.xlu0 %977
        %979 = vrot.lane.b32.xlu0 %v336, 40
        %v980 = vpop.permute.xlu0 %979
        %981 = vrot.lane.b32.xlu0 %v337, 40
        %v982 = vpop.permute.xlu0 %981
        %983 = vrot.lane.b32.xlu0 %v338, 40
        %v984 = vpop.permute.xlu0 %983
        %985 = vrot.lane.b32.xlu0 %v339, 40
        %v986 = vpop.permute.xlu0 %985
        %987 = vrot.lane.b32.xlu0 %v340, 40
        %v988 = vpop.permute.xlu0 %987
        %989 = vrot.lane.b32.xlu0 %v341, 40
        %v990 = vpop.permute.xlu0 %989
        %991 = vrot.lane.b32.xlu0 %v342, 40
        %v992 = vpop.permute.xlu0 %991
        %993 = vrot.lane.b32.xlu0 %v343, 40
        %v994 = vpop.permute.xlu0 %993
        %995 = vrot.lane.b32.xlu0 %v344, 40
        %v996 = vpop.permute.xlu0 %995
        %997 = vrot.lane.b32.xlu0 %v345, 40
        %v998 = vpop.permute.xlu0 %997
        %999 = vrot.lane.b32.xlu0 %v346, 40
        %v1000 = vpop.permute.xlu0 %999
        %1001 = vrot.lane.b32.xlu0 %v347, 40
        %v1002 = vpop.permute.xlu0 %1001
        %1003 = vrot.lane.b32.xlu0 %v348, 40
        %v1004 = vpop.permute.xlu0 %1003
        %1005 = vrot.lane.b32.xlu0 %v349, 40
        %v1006 = vpop.permute.xlu0 %1005
        %1039 = vrot.lane.b32.xlu0 %v350, 44
        %v1040 = vpop.permute.xlu0 %1039
        %1041 = vrot.lane.b32.xlu0 %v351, 44
        %v1042 = vpop.permute.xlu0 %1041
        %1043 = vrot.lane.b32.xlu0 %v352, 44
        %v1044 = vpop.permute.xlu0 %1043
        %1045 = vrot.lane.b32.xlu0 %v353, 44
        %v1046 = vpop.permute.xlu0 %1045
        %1047 = vrot.lane.b32.xlu0 %v354, 44
        %v1048 = vpop.permute.xlu0 %1047
        %1049 = vrot.lane.b32.xlu0 %v355, 44
        %v1050 = vpop.permute.xlu0 %1049
        %1051 = vrot.lane.b32.xlu0 %v356, 44
        %v1052 = vpop.permute.xlu0 %1051
        %1053 = vrot.lane.b32.xlu0 %v357, 44
        %v1054 = vpop.permute.xlu0 %1053
        %1055 = vrot.lane.b32.xlu0 %v358, 44
        %v1056 = vpop.permute.xlu0 %1055
        %1057 = vrot.lane.b32.xlu0 %v359, 44
        %v1058 = vpop.permute.xlu0 %1057
        %1059 = vrot.lane.b32.xlu0 %v360, 44
        %v1060 = vpop.permute.xlu0 %1059
        %1061 = vrot.lane.b32.xlu0 %v361, 44
        %v1062 = vpop.permute.xlu0 %1061
        %1063 = vrot.lane.b32.xlu0 %v362, 44
        %v1064 = vpop.permute.xlu0 %1063
        %1065 = vrot.lane.b32.xlu0 %v363, 44
        %v1066 = vpop.permute.xlu0 %1065
        %1067 = vrot.lane.b32.xlu0 %v364, 44
        %v1068 = vpop.permute.xlu0 %1067
        %1069 = vrot.lane.b32.xlu0 %v365, 44
        %v1070 = vpop.permute.xlu0 %1069
        %1103 = vrot.lane.b32.xlu0 %v367, 48
        %v1104 = vpop.permute.xlu0 %1103
        %1105 = vrot.lane.b32.xlu0 %v368, 48
        %v1106 = vpop.permute.xlu0 %1105
        %1107 = vrot.lane.b32.xlu0 %v369, 48
        %v1108 = vpop.permute.xlu0 %1107
        %1109 = vrot.lane.b32.xlu0 %v370, 48
        %v1110 = vpop.permute.xlu0 %1109
        %1111 = vrot.lane.b32.xlu0 %v371, 48
        %v1112 = vpop.permute.xlu0 %1111
        %1113 = vrot.lane.b32.xlu0 %v372, 48
        %v1114 = vpop.permute.xlu0 %1113
        %1115 = vrot.lane.b32.xlu0 %v373, 48
        %v1116 = vpop.permute.xlu0 %1115
        %1117 = vrot.lane.b32.xlu0 %v374, 48
        %v1118 = vpop.permute.xlu0 %1117
        %1119 = vrot.lane.b32.xlu0 %v375, 48
        %v1120 = vpop.permute.xlu0 %1119
        %1121 = vrot.lane.b32.xlu0 %v376, 48
        %v1122 = vpop.permute.xlu0 %1121
        %1123 = vrot.lane.b32.xlu0 %v377, 48
        %v1124 = vpop.permute.xlu0 %1123
        %1125 = vrot.lane.b32.xlu0 %v378, 48
        %v1126 = vpop.permute.xlu0 %1125
        %1127 = vrot.lane.b32.xlu0 %v379, 48
        %v1128 = vpop.permute.xlu0 %1127
        %1129 = vrot.lane.b32.xlu0 %v380, 48
        %v1130 = vpop.permute.xlu0 %1129
        %1131 = vrot.lane.b32.xlu0 %v381, 48
        %v1132 = vpop.permute.xlu0 %1131
        %1133 = vrot.lane.b32.xlu0 %v382, 48
        %v1134 = vpop.permute.xlu0 %1133
        %vm1151 = vcmask 31744
        %v1152 = vsel %vm1151, %v170, %v400
        %v1153 = vsel %vm1151, %v171, %v402
        %v1154 = vsel %vm1151, %v172, %v404
        %v1155 = vsel %vm1151, %v173, %v406
        %v1156 = vsel %vm1151, %v174, %v408
        %v1157 = vsel %vm1151, %v175, %v410
        %v1158 = vsel %vm1151, %v176, %v412
        %v1159 = vsel %vm1151, %v177, %v414
        %v1160 = vsel %vm1151, %v178, %v416
        %v1161 = vsel %vm1151, %v179, %v418
        %v1162 = vsel %vm1151, %v180, %v420
        %v1163 = vsel %vm1151, %v181, %v422
        %v1164 = vsel %vm1151, %v182, %v424
        %v1165 = vsel %vm1151, %v183, %v426
        %v1166 = vsel %vm1151, %v184, %v428
        %v1167 = vsel %vm1151, %v185, %v430
        %vm1168 = vcmask 64512
        %v1169 = vsel %vm1168, %v1152, %v464
        %v1170 = vsel %vm1168, %v1153, %v466
        %v1171 = vsel %vm1168, %v1154, %v468
        %v1172 = vsel %vm1168, %v1155, %v470
        %v1173 = vsel %vm1168, %v1156, %v472
        %v1174 = vsel %vm1168, %v1157, %v474
        %v1175 = vsel %vm1168, %v1158, %v476
        %v1176 = vsel %vm1168, %v1159, %v478
        %v1177 = vsel %vm1168, %v1160, %v480
        %v1178 = vsel %vm1168, %v1161, %v482
        %v1179 = vsel %vm1168, %v1162, %v484
        %v1180 = vsel %vm1168, %v1163, %v486
        %v1181 = vsel %vm1168, %v1164, %v488
        %v1182 = vsel %vm1168, %v1165, %v490
        %v1183 = vsel %vm1168, %v1166, %v492
        %v1184 = vsel %vm1168, %v1167, %v494
        %vm1185 = vcmask 97280
        %v1186 = vsel %vm1185, %v1169, %v528
        %v1187 = vsel %vm1185, %v1170, %v530
        %v1188 = vsel %vm1185, %v1171, %v532
        %v1189 = vsel %vm1185, %v1172, %v534
        %v1190 = vsel %vm1185, %v1173, %v536
        %v1191 = vsel %vm1185, %v1174, %v538
        %v1192 = vsel %vm1185, %v1175, %v540
        %v1193 = vsel %vm1185, %v1176, %v542
        %v1194 = vsel %vm1185, %v1177, %v544
        %v1195 = vsel %vm1185, %v1178, %v546
        %v1196 = vsel %vm1185, %v1179, %v548
        %v1197 = vsel %vm1185, %v1180, %v550
        %v1198 = vsel %vm1185, %v1181, %v552
        %v1199 = vsel %vm1185, %v1182, %v554
        %v1200 = vsel %vm1185, %v1183, %v556
        %v1201 = vsel %vm1185, %v1184, %v558
        %vm1202 = vcmask 130048
        %v1203 = vsel %vm1202, %v1186, %v592
        %v1204 = vsel %vm1202, %v1187, %v594
        %v1205 = vsel %vm1202, %v1188, %v596
        %v1206 = vsel %vm1202, %v1189, %v598
        %v1207 = vsel %vm1202, %v1190, %v600
        %v1208 = vsel %vm1202, %v1191, %v602
        %v1209 = vsel %vm1202, %v1192, %v604
        %v1210 = vsel %vm1202, %v1193, %v606
        %v1211 = vsel %vm1202, %v1194, %v608
        %v1212 = vsel %vm1202, %v1195, %v610
        %v1213 = vsel %vm1202, %v1196, %v612
        %v1214 = vsel %vm1202, %v1197, %v614
        %v1215 = vsel %vm1202, %v1198, %v616
        %v1216 = vsel %vm1202, %v1199, %v618
        %v1217 = vsel %vm1202, %v1200, %v620
        %v1218 = vsel %vm1202, %v1201, %v622
        %vm1219 = vcmask 162816
        %v1220 = vsel %vm1219, %v1203, %v656
        %v1221 = vsel %vm1219, %v1204, %v658
        %v1222 = vsel %vm1219, %v1205, %v660
        %v1223 = vsel %vm1219, %v1206, %v662
        %v1224 = vsel %vm1219, %v1207, %v664
        %v1225 = vsel %vm1219, %v1208, %v666
        %v1226 = vsel %vm1219, %v1209, %v668
        %v1227 = vsel %vm1219, %v1210, %v670
        %v1228 = vsel %vm1219, %v1211, %v672
        %v1229 = vsel %vm1219, %v1212, %v674
        %v1230 = vsel %vm1219, %v1213, %v676
        %v1231 = vsel %vm1219, %v1214, %v678
        %v1232 = vsel %vm1219, %v1215, %v680
        %v1233 = vsel %vm1219, %v1216, %v682
        %v1234 = vsel %vm1219, %v1217, %v684
        %v1235 = vsel %vm1219, %v1218, %v686
        %vm1236 = vcmask 195584
        %v1237 = vsel %vm1236, %v1220, %v720
        %v1238 = vsel %vm1236, %v1221, %v722
        %v1239 = vsel %vm1236, %v1222, %v724
        %v1240 = vsel %vm1236, %v1223, %v726
        %v1241 = vsel %vm1236, %v1224, %v728
        %v1242 = vsel %vm1236, %v1225, %v730
        %v1243 = vsel %vm1236, %v1226, %v732
        %v1244 = vsel %vm1236, %v1227, %v734
        %v1245 = vsel %vm1236, %v1228, %v736
        %v1246 = vsel %vm1236, %v1229, %v738
        %v1247 = vsel %vm1236, %v1230, %v740
        %v1248 = vsel %vm1236, %v1231, %v742
        %v1249 = vsel %vm1236, %v1232, %v744
        %v1250 = vsel %vm1236, %v1233, %v746
        %v1251 = vsel %vm1236, %v1234, %v748
        %v1252 = vsel %vm1236, %v1235, %v750
        %vm1253 = vcmask 228352
        %v1254 = vsel %vm1253, %v1237, %v784
        %v1255 = vsel %vm1253, %v1238, %v786
        %v1256 = vsel %vm1253, %v1239, %v788
        %v1257 = vsel %vm1253, %v1240, %v790
        %v1258 = vsel %vm1253, %v1241, %v792
        %v1259 = vsel %vm1253, %v1242, %v794
        %v1260 = vsel %vm1253, %v1243, %v796
        %v1261 = vsel %vm1253, %v1244, %v798
        %v1262 = vsel %vm1253, %v1245, %v800
        %v1263 = vsel %vm1253, %v1246, %v802
        %v1264 = vsel %vm1253, %v1247, %v804
        %v1265 = vsel %vm1253, %v1248, %v806
        %v1266 = vsel %vm1253, %v1249, %v808
        %v1267 = vsel %vm1253, %v1250, %v810
        %v1268 = vsel %vm1253, %v1251, %v812
        %v1269 = vsel %vm1253, %v1252, %v814
        %vm1270 = vcmask 261120
        %v1271 = vsel %vm1270, %v1254, %v848
        %v1272 = vsel %vm1270, %v1255, %v850
        %v1273 = vsel %vm1270, %v1256, %v852
        %v1274 = vsel %vm1270, %v1257, %v854
        %v1275 = vsel %vm1270, %v1258, %v856
        %v1276 = vsel %vm1270, %v1259, %v858
        %v1277 = vsel %vm1270, %v1260, %v860
        %v1278 = vsel %vm1270, %v1261, %v862
        %v1279 = vsel %vm1270, %v1262, %v864
        %v1280 = vsel %vm1270, %v1263, %v866
        %v1281 = vsel %vm1270, %v1264, %v868
        %v1282 = vsel %vm1270, %v1265, %v870
        %v1283 = vsel %vm1270, %v1266, %v872
        %v1284 = vsel %vm1270, %v1267, %v874
        %v1285 = vsel %vm1270, %v1268, %v876
        %v1286 = vsel %vm1270, %v1269, %v878
        %vm1287 = vcmask 293888
        %v1288 = vsel %vm1287, %v1271, %v912
        %v1289 = vsel %vm1287, %v1272, %v914
        %v1290 = vsel %vm1287, %v1273, %v916
        %v1291 = vsel %vm1287, %v1274, %v918
        %v1292 = vsel %vm1287, %v1275, %v920
        %v1293 = vsel %vm1287, %v1276, %v922
        %v1294 = vsel %vm1287, %v1277, %v924
        %v1295 = vsel %vm1287, %v1278, %v926
        %v1296 = vsel %vm1287, %v1279, %v928
        %v1297 = vsel %vm1287, %v1280, %v930
        %v1298 = vsel %vm1287, %v1281, %v932
        %v1299 = vsel %vm1287, %v1282, %v934
        %v1300 = vsel %vm1287, %v1283, %v936
        %v1301 = vsel %vm1287, %v1284, %v938
        %v1302 = vsel %vm1287, %v1285, %v940
        %v1303 = vsel %vm1287, %v1286, %v942
        %vm1304 = vcmask 326656
        %v1305 = vsel %vm1304, %v1288, %v976
        %v1306 = vsel %vm1304, %v1289, %v978
        %v1307 = vsel %vm1304, %v1290, %v980
        %v1308 = vsel %vm1304, %v1291, %v982
        %v1309 = vsel %vm1304, %v1292, %v984
        %v1310 = vsel %vm1304, %v1293, %v986
        %v1311 = vsel %vm1304, %v1294, %v988
        %v1312 = vsel %vm1304, %v1295, %v990
        %v1313 = vsel %vm1304, %v1296, %v992
        %v1314 = vsel %vm1304, %v1297, %v994
        %v1315 = vsel %vm1304, %v1298, %v996
        %v1316 = vsel %vm1304, %v1299, %v998
        %v1317 = vsel %vm1304, %v1300, %v1000
        %v1318 = vsel %vm1304, %v1301, %v1002
        %v1319 = vsel %vm1304, %v1302, %v1004
        %v1320 = vsel %vm1304, %v1303, %v1006
        %vm1321 = vcmask 359424
        %v1322 = vsel %vm1321, %v1305, %v1040
        %v1323 = vsel %vm1321, %v1306, %v1042
        %v1324 = vsel %vm1321, %v1307, %v1044
        %v1325 = vsel %vm1321, %v1308, %v1046
        %v1326 = vsel %vm1321, %v1309, %v1048
        %v1327 = vsel %vm1321, %v1310, %v1050
        %v1328 = vsel %vm1321, %v1311, %v1052
        %v1329 = vsel %vm1321, %v1312, %v1054
        %v1330 = vsel %vm1321, %v1313, %v1056
        %v1331 = vsel %vm1321, %v1314, %v1058
        %v1332 = vsel %vm1321, %v1315, %v1060
        %v1333 = vsel %vm1321, %v1316, %v1062
        %v1334 = vsel %vm1321, %v1317, %v1064
        %v1335 = vsel %vm1321, %v1318, %v1066
        %v1336 = vsel %vm1321, %v1319, %v1068
        %v1337 = vsel %vm1321, %v1320, %v1070
        %vm1338 = vcmask 392192
        %v1339 = vsel %vm1338, %v1322, %v1104
        %v1340 = vsel %vm1338, %v1323, %v1106
        %v1341 = vsel %vm1338, %v1324, %v1108
        %v1342 = vsel %vm1338, %v1325, %v1110
        %v1343 = vsel %vm1338, %v1326, %v1112
        %v1344 = vsel %vm1338, %v1327, %v1114
        %v1345 = vsel %vm1338, %v1328, %v1116
        %v1346 = vsel %vm1338, %v1329, %v1118
        %v1347 = vsel %vm1338, %v1330, %v1120
        %v1348 = vsel %vm1338, %v1331, %v1122
        %v1349 = vsel %vm1338, %v1332, %v1124
        %v1350 = vsel %vm1338, %v1333, %v1126
        %v1351 = vsel %vm1338, %v1334, %v1128
        %v1352 = vsel %vm1338, %v1335, %v1130
        %v1353 = vsel %vm1338, %v1336, %v1132
        %v1354 = vsel %vm1338, %v1337, %v1134
        %v1355 = vld [vmem:[%s1] sm:$0xff]
        %v1356 = vld [vmem:[%s1 + $0x8] sm:$0xff]
        %v1357 = vld [vmem:[%s1 + $0x10] sm:$0xff]
        %v1358 = vld [vmem:[%s1 + $0x18] sm:$0xff]
        %v1359 = vld [vmem:[%s1 + $0x20] sm:$0xff]
        %v1360 = vld [vmem:[%s1 + $0x28] sm:$0xff]
        %v1361 = vld [vmem:[%s1 + $0x30] sm:$0xf]
        %v1362 = vld [vmem:[%s2] sm:$0x1]
        %v1364 = vlaneseq
        %v1365 = vshrl.u32 %v1364, 7
        %v1366 = vsub.s32 0, %v1365
        %v1367 = vrot.slane %v1362, %v1366
        %vm1369 = vcmask 424960
        %v1371 = vsel %vm1369, %v1339, 0
        %v1374 = vsel %vm1369, %v1340, 0
        %v1377 = vsel %vm1369, %v1341, 0
        %v1380 = vsel %vm1369, %v1342, 0
        %v1383 = vsel %vm1369, %v1343, 0
        %v1386 = vsel %vm1369, %v1344, 0
        %v1389 = vsel %vm1369, %v1345, 0
        %v1392 = vsel %vm1369, %v1346, 0
        %v1395 = vsel %vm1369, %v1347, 0
        %v1398 = vsel %vm1369, %v1348, 0
        %v1401 = vsel %vm1369, %v1349, 0
        %v1404 = vsel %vm1369, %v1350, 0
        %v1407 = vsel %vm1369, %v1351, 0
        %v1410 = vsel %vm1369, %v1352, 0
        %v1413 = vsel %vm1369, %v1353, 0
        %v1416 = vsel %vm1369, %v1354, 0
        %vm1418 = vcmask 1043456
        %v1420 = vsel %vm1418, %v1361, 0
        %1422 = vmatprep.subr.mxu0 0.0
        %1423 = vmatpush1.msra.mxu0 %v1355
        %1424 = vmatprep.subr.mxu0 0.0
        %1425 = vmatpush1.msra.mxu0 %v1356
        %1426 = vmatprep.subr.mxu0 0.0
        %1427 = vmatpush1.msra.mxu0 %v1357
        %1428 = vmatprep.subr.mxu0 0.0
        %1429 = vmatpush1.msra.mxu0 %v1358
        %1430 = vmatprep.subr.mxu0 0.0
        %1431 = vmatpush1.msra.mxu0 %v1359
        %1432 = vmatprep.subr.mxu0 0.0
        %1433 = vmatpush1.msra.mxu0 %v1360
        %1434 = vmatprep.subr.mxu0 0.0
        %1435 = vmatpush1.msra.mxu0 %v1420
        %1436 = vmatprep.subr.mxu0 0.0
        %1437 = vmatpush1.msra.mxu0 0.0
        %1438 = vmatprep.subr.mxu0 0.0
        %1439 = vmatpush1.msra.mxu0 0.0
        %1440 = vmatprep.subr.mxu0 0.0
        %1441 = vmatpush1.msra.mxu0 0.0
        %1442 = vmatprep.subr.mxu0 0.0
        %1443 = vmatpush1.msra.mxu0 0.0
        %1444 = vmatprep.subr.mxu0 0.0
        %1445 = vmatpush1.msra.mxu0 0.0
        %1446 = vmatprep.subr.mxu0 0.0
        %1447 = vmatpush1.msra.mxu0 0.0
        %1448 = vmatprep.subr.mxu0 0.0
        %1449 = vmatpush1.msra.mxu0 0.0
        %1450 = vmatprep.subr.mxu0 0.0
        %1451 = vmatpush1.msra.mxu0 0.0
        %1452 = vmatprep.subr.mxu0 0.0
        %1453 = vmatpush1.msra.mxu0 0.0
        %1454 = vmatprep.subr.mxu0 0.0
        %1455 = vmatpush1.msra.mxu0 0.0
        %1456 = vmatprep.subr.mxu0 0.0
        %1457 = vmatpush1.msra.mxu0 0.0
        %1458 = vmatprep.subr.mxu0 0.0
        %1459 = vmatpush1.msra.mxu0 0.0
        %1460 = vmatprep.subr.mxu0 0.0
        %1461 = vmatpush1.msra.mxu0 0.0
        %1462 = vmatprep.subr.mxu0 0.0
        %1463 = vmatpush1.msra.mxu0 0.0
        %1464 = vmatprep.subr.mxu0 0.0
        %1465 = vmatpush1.msra.mxu0 0.0
        %1466 = vmatprep.subr.mxu0 0.0
        %1467 = vmatpush1.msra.mxu0 0.0
        %1468 = vmatprep.subr.mxu0 0.0
        %1469 = vmatpush1.msra.mxu0 0.0
        %1470 = vmatprep.subr.mxu0 0.0
        %1471 = vmatpush1.msra.mxu0 0.0
        %1472 = vmatprep.subr.mxu0 0.0
        %1473 = vmatpush1.msra.mxu0 0.0
        %1474 = vmatprep.subr.mxu0 0.0
        %1475 = vmatpush1.msra.mxu0 0.0
        %1476 = vmatprep.subr.mxu0 0.0
        %1477 = vmatpush1.msra.mxu0 0.0
        %1478 = vmatprep.subr.mxu0 0.0
        %1479 = vmatpush1.msra.mxu0 0.0
        %1480 = vmatprep.subr.mxu0 0.0
        %1481 = vmatpush1.msra.mxu0 0.0
        %1482 = vmatprep.subr.mxu0 0.0
        %1483 = vmatpush1.msra.mxu0 0.0
        %1484 = vmatprep.subr.mxu0 0.0
        %1485 = vmatpush1.msra.mxu0 0.0
        %1486 = vmatprep.mubr.f32.mxu0 0.0
        %1487 = vmatmul.mubr.f32.gmra.mrb[0].mxu0 %v1371
        %v1488 = vpop.f32.mrb[0].mxu0
        %v1489 = vadd.f32 %v1367, %v1488
        %v1490 = vpop.f32.mrb[0].mxu0
        %1491 = vmatprep.mubr.f32.mxu0 0.0
        %1492 = vmatmul.mubr.f32.gmra.mrb[0].mxu0 %v1374
        %v1493 = vpop.f32.mrb[0].mxu0
        %v1494 = vadd.f32 %v1367, %v1493
        %v1495 = vpop.f32.mrb[0].mxu0
        %1496 = vmatprep.mubr.f32.mxu0 0.0
        %1497 = vmatmul.mubr.f32.gmra.mrb[0].mxu0 %v1377
        %v1498 = vpop.f32.mrb[0].mxu0
        %v1499 = vadd.f32 %v1367, %v1498
        %v1500 = vpop.f32.mrb[0].mxu0
        %1501 = vmatprep.mubr.f32.mxu0 0.0
        %1502 = vmatmul.mubr.f32.gmra.mrb[0].mxu0 %v1380
        %v1503 = vpop.f32.mrb[0].mxu0
        %v1504 = vadd.f32 %v1367, %v1503
        %v1505 = vpop.f32.mrb[0].mxu0
        %1506 = vmatprep.mubr.f32.mxu0 0.0
        %1507 = vmatmul.mubr.f32.gmra.mrb[0].mxu0 %v1383
        %v1508 = vpop.f32.mrb[0].mxu0
        %v1509 = vadd.f32 %v1367, %v1508
        %v1510 = vpop.f32.mrb[0].mxu0
        %1511 = vmatprep.mubr.f32.mxu0 0.0
        %1512 = vmatmul.mubr.f32.gmra.mrb[0].mxu0 %v1386
        %v1513 = vpop.f32.mrb[0].mxu0
        %v1514 = vadd.f32 %v1367, %v1513
        %v1515 = vpop.f32.mrb[0].mxu0
        %1516 = vmatprep.mubr.f32.mxu0 0.0
        %1517 = vmatmul.mubr.f32.gmra.mrb[0].mxu0 %v1389
        %v1518 = vpop.f32.mrb[0].mxu0
        %v1519 = vadd.f32 %v1367, %v1518
        %v1520 = vpop.f32.mrb[0].mxu0
        %1521 = vmatprep.mubr.f32.mxu0 0.0
        %1522 = vmatmul.mubr.f32.gmra.mrb[0].mxu0 %v1392
        %v1523 = vpop.f32.mrb[0].mxu0
        %v1524 = vadd.f32 %v1367, %v1523
        %v1525 = vpop.f32.mrb[0].mxu0
        %1526 = vmatprep.mubr.f32.mxu0 0.0
        %1527 = vmatmul.mubr.f32.gmra.mrb[0].mxu0 %v1395
        %v1528 = vpop.f32.mrb[0].mxu0
        %v1529 = vadd.f32 %v1367, %v1528
        %v1530 = vpop.f32.mrb[0].mxu0
        %1531 = vmatprep.mubr.f32.mxu0 0.0
        %1532 = vmatmul.mubr.f32.gmra.mrb[0].mxu0 %v1398
        %v1533 = vpop.f32.mrb[0].mxu0
        %v1534 = vadd.f32 %v1367, %v1533
        %v1535 = vpop.f32.mrb[0].mxu0
        %1536 = vmatprep.mubr.f32.mxu0 0.0
        %1537 = vmatmul.mubr.f32.gmra.mrb[0].mxu0 %v1401
        %v1538 = vpop.f32.mrb[0].mxu0
        %v1539 = vadd.f32 %v1367, %v1538
        %v1540 = vpop.f32.mrb[0].mxu0
        %1541 = vmatprep.mubr.f32.mxu0 0.0
        %1542 = vmatmul.mubr.f32.gmra.mrb[0].mxu0 %v1404
        %v1543 = vpop.f32.mrb[0].mxu0
        %v1544 = vadd.f32 %v1367, %v1543
        %v1545 = vpop.f32.mrb[0].mxu0
        %1546 = vmatprep.mubr.f32.mxu0 0.0
        %1547 = vmatmul.mubr.f32.gmra.mrb[0].mxu0 %v1407
        %v1548 = vpop.f32.mrb[0].mxu0
        %v1549 = vadd.f32 %v1367, %v1548
        %v1550 = vpop.f32.mrb[0].mxu0
        %1551 = vmatprep.mubr.f32.mxu0 0.0
        %1552 = vmatmul.mubr.f32.gmra.mrb[0].mxu0 %v1410
        %v1553 = vpop.f32.mrb[0].mxu0
        %v1554 = vadd.f32 %v1367, %v1553
        %v1555 = vpop.f32.mrb[0].mxu0
        %1556 = vmatprep.mubr.f32.mxu0 0.0
        %1557 = vmatmul.mubr.f32.gmra.mrb[0].mxu0 %v1413
        %v1558 = vpop.f32.mrb[0].mxu0
        %v1559 = vadd.f32 %v1367, %v1558
        %v1560 = vpop.f32.mrb[0].mxu0
        %1561 = vmatprep.mubr.f32.mxu0 0.0
        %1562 = vmatmul.mubr.f32.gmra.mrb[0].mxu0 %v1416
        %v1563 = vpop.f32.mrb[0].mxu0
        %v1564 = vadd.f32 %v1367, %v1563
        %v1565 = vpop.f32.mrb[0].mxu0
        %1566 = vdwg.mxu0
        %1567 = vst [vmem:[%s163] sm:$0xff] %v1489
        %1568 = vst [vmem:[%s163 + $0x8] sm:$0xff] %v1494
        %1569 = vst [vmem:[%s163 + $0x10] sm:$0xff] %v1499
        %1570 = vst [vmem:[%s163 + $0x18] sm:$0xff] %v1504
        %1571 = vst [vmem:[%s163 + $0x20] sm:$0xff] %v1509
        %1572 = vst [vmem:[%s163 + $0x28] sm:$0xff] %v1514
        %1573 = vst [vmem:[%s163 + $0x30] sm:$0xff] %v1519
        %1574 = vst [vmem:[%s163 + $0x38] sm:$0xff] %v1524
        %1575 = vst [vmem:[%s163 + $0x40] sm:$0xff] %v1529
        %1576 = vst [vmem:[%s163 + $0x48] sm:$0xff] %v1534
        %1577 = vst [vmem:[%s163 + $0x50] sm:$0xff] %v1539
        %1578 = vst [vmem:[%s163 + $0x58] sm:$0xff] %v1544
        %1579 = vst [vmem:[%s163 + $0x60] sm:$0xff] %v1549
        %1580 = vst [vmem:[%s163 + $0x68] sm:$0xff] %v1554
        %1581 = vst [vmem:[%s163 + $0x70] sm:$0xff] %v1559
        %1582 = vst [vmem:[%s163 + $0x78] sm:$0xff] %v1564
        %s1583 = sand.u32 %s93, 1
        %s1584 = scalar_lea.sflag [#allocation3], %s1583
        %s1585 = sand.u32 %s93, 1
        %s1586 = smul.addr %s1585, 128
        %s1587 = scalar_lea.vmem [#allocation2], %s1586
        // Predicated region
        $region33: #{tpu_custom_call.1} parent=31 // pred_check
          %p1588 = pneg %p103
        $region34: #{tpu_custom_call.1} parent=31 // pred_check_branch
          %1590 = sbr.rel (%p1588) target = $region36
        $region35: #{tpu_custom_call.1} parent=31 // pred_region
          %s1592 = ssub.s32 2048, 2048
          %1593 = vsyncadd %s1584, %s1592
          %s1594 = smul.addr %s17, 16
          %s1595 = smul.addr %s1594, 128
          %s1596 = scalar_lea.hbm %s3, %s1595
          %s1597 = sshll.u32 %s1587, 4
          %s1598 = int_to_ptr.vmem [resolvable:$true] %s1597
          %1603 = dma.vmem_to_hbm [thread:$0]  %s1598, 2048, %s1596, %s1584, 128, 128, 8
        $region36: #{tpu_custom_call.1} parent=31 // pred_fallthru
          _
      $region32: #{tpu_custom_call.1} parent=5 // pred_fallthru
        _
      %p1604 = scmp.le.s32.totalorder 2, %s12
      // Predicated region
      $region37: #{tpu_custom_call.1} parent=5 // pred_check
        %p1605 = pneg %p1604
      $region38: #{tpu_custom_call.1} parent=5 // pred_check_branch
        %1607 = sbr.rel (%p1605) target = $region40
      $region39: #{tpu_custom_call.1} parent=5 // pred_region
        %s1608 = ssub.s32 %s12, 2
        // Predicated region
        $region41: #{tpu_custom_call.1} parent=39 // pred_check
          %p1609 = pneg %p109
        $region42: #{tpu_custom_call.1} parent=39 // pred_check_branch
          %1611 = sbr.rel (%p1609) target = $region44
        $region43: #{tpu_custom_call.1} parent=39 // pred_region
          %s1612 = sand.u32 %s94, 1
          %s1613 = scalar_lea.sflag [#allocation3], %s1612
          %s1614 = sand.u32 %s94, 1
          %s1615 = smul.addr %s1614, 128
          %s1616 = scalar_lea.vmem [#allocation2], %s1615
          %1617 = dma.done %s1613, 2048
        $region44: #{tpu_custom_call.1} parent=39 // pred_fallthru
          _
      $region40: #{tpu_custom_call.1} parent=5 // pred_fallthru
        _
    $region6: #{tpu_custom_call.1} parent=1 // loop_footer
      %s16 = sadd.s32 1, %s12
    $region7: #{tpu_custom_call.1} parent=1 // loop_footer_branch
      %11 = sbr.rel target = $region3
    $region8: #{tpu_custom_call.1} parent=1 // loop_exit
      _
    %1618 = vsyncpa [#allocation3], 1
    %s1619 = scalar_lea.sflag [#allocation3], 1
    %1620 = vsyncpa %s1619, 1

</llo_original>
